<compile_context>
chip_gen: v7x
topology: tpu7x:2x2x1
jax: 0.10.0
libtpu: 0.0.40
codegen_flags: <defaults>
</compile_context>

<pallas_src>
import functools

import jax
import jax.numpy as jnp
from jax.experimental import pallas as pl
from jax.experimental.pallas import tpu as pltpu


def _round_up(x, m):
    return ((x + m - 1) // m) * m


def _critic_kernel(s_ref, a_ref, w1s_ref, w1a_ref, b1_ref, w2_ref, b2_ref,
                   w3_ref, b3_ref, o_ref):
    # s_ref: (TB, Ds), a_ref: (TB, Da)
    # w1s: (Ds, H), w1a: (Da, H), w2: (H, H), w3: (1, H) row, b3: (1,1) SMEM.

    # ----- layer 1: split matmul replaces the wrapper-side concat ---------
    s = s_ref[...].astype(jnp.bfloat16)
    a = a_ref[...].astype(jnp.bfloat16)
    h1 = jnp.dot(s, w1s_ref[...].astype(jnp.bfloat16),
                 preferred_element_type=jnp.float32)
    h1 = h1 + jnp.dot(a, w1a_ref[...].astype(jnp.bfloat16),
                      preferred_element_type=jnp.float32)
    h1 = jnp.maximum(h1 + b1_ref[...], 0.0)            # f32 bias + ReLU (VPU)

    # ----- layer 2 ---------------------------------------------------------
    h2 = jnp.dot(h1.astype(jnp.bfloat16), w2_ref[...].astype(jnp.bfloat16),
                 preferred_element_type=jnp.float32)
    h2 = jnp.maximum(h2 + b2_ref[...], 0.0)

    # ----- layer 3: N=1 output -> VPU multiply + XLU lane reduction --------
    q = jnp.sum(h2 * w3_ref[...], axis=-1, keepdims=True)   # (TB, 1) f32
    o_ref[...] = (q + b3_ref[0, 0]).astype(o_ref.dtype)


@functools.partial(jax.jit, static_argnames=("block_b",))
def critic_forward(state, action, params, block_b=256):
    state = state.astype(jnp.float32)
    action = action.astype(jnp.float32)
    B, Ds = state.shape
    _, Da = action.shape
    w1, b1, w2, b2, w3, b3 = params
    H = w1.shape[1]

    # Split W1 into its state / action halves (removes the concat) and turn
    # the (H, 1) output weight into a (1, H) row for the VPU reduction.
    w1s = w1[:Ds, :]
    w1a = w1[Ds:, :]
    w3_row = w3.reshape(1, H)

    # Batch tile: as large as the batch allows, capped at block_b, always a
    # multiple of 8 (f32 sublanes). Partial last tiles are handled by pl.cdiv
    # (masked output writeback; rows are independent so padded rows are safe).
    bb = min(block_b, _round_up(B, 8))
    grid = (pl.cdiv(B, bb),)

    flops = 2 * B * (Ds * H + Da * H + H * H + H)
    bytes_accessed = 4 * (B * (Ds + Da) + B
                          + (Ds + Da) * H + H + H * H + H + H + 1)
    cost = pl.CostEstimate(flops=flops, transcendentals=0,
                           bytes_accessed=bytes_accessed)

    return pl.pallas_call(
        _critic_kernel,
        out_shape=jax.ShapeDtypeStruct((B, 1), jnp.float32),
        grid_spec=pltpu.PrefetchScalarGridSpec(
            num_scalar_prefetch=0,
            grid=grid,
            in_specs=[
                # batch tiles of state / action
                pl.BlockSpec((bb, Ds), lambda i: (i, 0)),
                pl.BlockSpec((bb, Da), lambda i: (i, 0)),
                # weights / biases: full tensors, resident across batch tiles
                pl.BlockSpec((Ds, H), lambda i: (0, 0)),
                pl.BlockSpec((Da, H), lambda i: (0, 0)),
                pl.BlockSpec((1, H), lambda i: (0, 0)),
                pl.BlockSpec((H, H), lambda i: (0, 0)),
                pl.BlockSpec((1, H), lambda i: (0, 0)),
                pl.BlockSpec((1, H), lambda i: (0, 0)),
                # b3 scalar lives in SMEM (frees a vector-load slot)
                pl.BlockSpec(memory_space=pltpu.MemorySpace.SMEM),
            ],
            out_specs=pl.BlockSpec((bb, 1), lambda i: (i, 0)),
        ),
        compiler_params=pltpu.CompilerParams(
            dimension_semantics=("parallel",)),
        cost_estimate=cost,
    )(state, action, w1s, w1a, b1, w2, b2, w3_row, b3)


def init_critic_params(key, state_dim, action_dim, hidden=256):
    """Deterministic init mimicking nn.Linear default (U[-1/sqrt(fan_in), ...])."""
    d_in = state_dim + action_dim
    ks = jax.random.split(key, 6)

    def lin(kw, kb, fan_in, fan_out):
        bound = 1.0 / jnp.sqrt(fan_in)
        w = jax.random.uniform(kw, (fan_in, fan_out), jnp.float32, -bound, bound)
        b = jax.random.uniform(kb, (1, fan_out), jnp.float32, -bound, bound)
        return w, b

    w1, b1 = lin(ks[0], ks[1], d_in, hidden)
    w2, b2 = lin(ks[2], ks[3], hidden, hidden)
    w3, b3 = lin(ks[4], ks[5], hidden, 1)
    return (w1, b1, w2, b2, w3, b3)


def critic_ref(state, action, params):
    """Pure-JAX f32 reference."""
    w1, b1, w2, b2, w3, b3 = params
    x = jnp.concatenate([state, action], axis=1)
    x = jnp.maximum(x @ w1 + b1, 0.0)
    x = jnp.maximum(x @ w2 + b2, 0.0)
    return x @ w3 + b3


def critic_ref_bf16(state, action, params):
    """Reference matching the kernel's bf16-operand / f32-accumulate math."""
    w1, b1, w2, b2, w3, b3 = params
    x = jnp.concatenate([state, action], axis=1)
    h1 = jnp.dot(x.astype(jnp.bfloat16), w1.astype(jnp.bfloat16),
                 preferred_element_type=jnp.float32)
    h1 = jnp.maximum(h1 + b1, 0.0)
    h2 = jnp.dot(h1.astype(jnp.bfloat16), w2.astype(jnp.bfloat16),
                 preferred_element_type=jnp.float32)
    h2 = jnp.maximum(h2 + b2, 0.0)
    return h2 @ w3 + b3


def _check(q, state, action, params):
    q_bf16 = critic_ref_bf16(state, action, params)
    q_f32 = critic_ref(state, action, params)
    assert jnp.allclose(q, q_bf16, atol=1e-2, rtol=1e-2), "mismatch vs bf16 ref"
    assert jnp.allclose(q, q_f32, atol=7e-2, rtol=7e-2), "mismatch vs f32 ref"


if __name__ == "__main__":
    key = jax.random.PRNGKey(0)
    k_param, k_s1, k_a1, k_s2, k_a2 = jax.random.split(key, 5)

    state_dim, action_dim = 16, 8
    params = init_critic_params(k_param, state_dim, action_dim)

    # Small demo batch (single grid step).
    B1 = 8
    state1 = jax.random.normal(k_s1, (B1, state_dim), jnp.float32)
    action1 = jax.random.normal(k_a1, (B1, action_dim), jnp.float32)
    q1 = jax.block_until_ready(critic_forward(state1, action1, params))
    assert q1.shape == (B1, 1), q1.shape
    _check(q1, state1, action1, params)

    # Larger batch, not a multiple of the tile: exercises a 2-step grid with a
    # partial last tile (and lets the parallel axis use both v7x TensorCores).
    B2 = 300
    state2 = jax.random.normal(k_s2, (B2, state_dim), jnp.float32)
    action2 = jax.random.normal(k_a2, (B2, action_dim), jnp.float32)
    q2 = jax.block_until_ready(critic_forward(state2, action2, params))
    assert q2.shape == (B2, 1), q2.shape
    _check(q2, state2, action2, params)

    print("KERNEL_OK")
</pallas_src>

<mosaic_0001>
module attributes {stable_mosaic.version = 11 : i64} {
  func.func @_critic_kernel(%arg0: i32, %arg1: memref<8x16xf32, #tpu.memory_space<vmem>>, %arg2: memref<8x8xf32, #tpu.memory_space<vmem>>, %arg3: memref<16x256xf32, #tpu.memory_space<vmem>>, %arg4: memref<8x256xf32, #tpu.memory_space<vmem>>, %arg5: memref<1x256xf32, #tpu.memory_space<vmem>>, %arg6: memref<256x256xf32, #tpu.memory_space<vmem>>, %arg7: memref<1x256xf32, #tpu.memory_space<vmem>>, %arg8: memref<1x256xf32, #tpu.memory_space<vmem>>, %arg9: memref<1x1xf32, #tpu.memory_space<smem>>, %arg10: memref<8x1xf32, #tpu.memory_space<vmem>>) attributes {dimension_semantics = [#tpu.dimension_semantics<parallel>], iteration_bounds = array<i64: 1>, scalar_prefetch = 0 : i64, scratch_operands = 0 : i64, tpu.core_type = #tpu.core_type<tc>, window_params = [{transform_indices = @transform_0, window_bounds = array<i64: 8, 16>}, {transform_indices = @transform_1, window_bounds = array<i64: 8, 8>}, {pipeline_mode = #tpu.pipeline_mode<synchronous>, transform_indices = @transform_2, window_bounds = array<i64: 16, 256>}, {pipeline_mode = #tpu.pipeline_mode<synchronous>, transform_indices = @transform_3, window_bounds = array<i64: 8, 256>}, {pipeline_mode = #tpu.pipeline_mode<synchronous>, transform_indices = @transform_4, window_bounds = array<i64: 1, 256>}, {pipeline_mode = #tpu.pipeline_mode<synchronous>, transform_indices = @transform_5, window_bounds = array<i64: 256, 256>}, {pipeline_mode = #tpu.pipeline_mode<synchronous>, transform_indices = @transform_6, window_bounds = array<i64: 1, 256>}, {pipeline_mode = #tpu.pipeline_mode<synchronous>, transform_indices = @transform_7, window_bounds = array<i64: 1, 256>}, {transform_indices = @transform_8, window_bounds = array<i64: 1, 1>}, {transform_indices = @transform_9, window_bounds = array<i64: 8, 1>}]} {
    %c0 = arith.constant 0 : index
    %c0_0 = arith.constant 0 : index
    %0 = vector.load %arg1[%c0, %c0_0] : memref<8x16xf32, #tpu.memory_space<vmem>>, vector<8x16xf32>
    %1 = arith.truncf %0 : vector<8x16xf32> to vector<8x16xbf16>
    %c0_1 = arith.constant 0 : index
    %c0_2 = arith.constant 0 : index
    %2 = vector.load %arg2[%c0_1, %c0_2] : memref<8x8xf32, #tpu.memory_space<vmem>>, vector<8x8xf32>
    %3 = arith.truncf %2 : vector<8x8xf32> to vector<8x8xbf16>
    %c0_3 = arith.constant 0 : index
    %c0_4 = arith.constant 0 : index
    %4 = vector.load %arg3[%c0_3, %c0_4] : memref<16x256xf32, #tpu.memory_space<vmem>>, vector<16x256xf32>
    %5 = arith.truncf %4 : vector<16x256xf32> to vector<16x256xbf16>
    %cst = arith.constant dense<0.000000e+00> : vector<8x256xf32>
    %6 = tpu.matmul %1, %5, %cst {dimension_numbers = #tpu.dot_dimension_numbers<[1], [0], [0], [1], [0, 0, 1, 1], [], []>} : vector<8x16xbf16>, vector<16x256xbf16>, vector<8x256xf32> -> vector<8x256xf32>
    %c0_5 = arith.constant 0 : index
    %c0_6 = arith.constant 0 : index
    %7 = vector.load %arg4[%c0_5, %c0_6] : memref<8x256xf32, #tpu.memory_space<vmem>>, vector<8x256xf32>
    %8 = arith.truncf %7 : vector<8x256xf32> to vector<8x256xbf16>
    %cst_7 = arith.constant dense<0.000000e+00> : vector<8x256xf32>
    %9 = tpu.matmul %3, %8, %cst_7 {dimension_numbers = #tpu.dot_dimension_numbers<[1], [0], [0], [1], [0, 0, 1, 1], [], []>} : vector<8x8xbf16>, vector<8x256xbf16>, vector<8x256xf32> -> vector<8x256xf32>
    %10 = arith.addf %6, %9 : vector<8x256xf32>
    %c0_8 = arith.constant 0 : index
    %c0_9 = arith.constant 0 : index
    %11 = vector.load %arg5[%c0_8, %c0_9] : memref<1x256xf32, #tpu.memory_space<vmem>>, vector<1x256xf32>
    %12 = vector.broadcast %11 : vector<1x256xf32> to vector<8x256xf32>
    %13 = arith.addf %10, %12 : vector<8x256xf32>
    %cst_10 = arith.constant 0.000000e+00 : f32
    %14 = vector.broadcast %cst_10 : f32 to vector<8x256xf32>
    %15 = arith.maximumf %13, %14 : vector<8x256xf32>
    %16 = arith.truncf %15 : vector<8x256xf32> to vector<8x256xbf16>
    %c0_11 = arith.constant 0 : index
    %c0_12 = arith.constant 0 : index
    %17 = vector.load %arg6[%c0_11, %c0_12] : memref<256x256xf32, #tpu.memory_space<vmem>>, vector<256x256xf32>
    %18 = arith.truncf %17 : vector<256x256xf32> to vector<256x256xbf16>
    %cst_13 = arith.constant dense<0.000000e+00> : vector<8x256xf32>
    %19 = tpu.matmul %16, %18, %cst_13 {dimension_numbers = #tpu.dot_dimension_numbers<[1], [0], [0], [1], [0, 0, 1, 1], [], []>} : vector<8x256xbf16>, vector<256x256xbf16>, vector<8x256xf32> -> vector<8x256xf32>
    %c0_14 = arith.constant 0 : index
    %c0_15 = arith.constant 0 : index
    %20 = vector.load %arg7[%c0_14, %c0_15] : memref<1x256xf32, #tpu.memory_space<vmem>>, vector<1x256xf32>
    %21 = vector.broadcast %20 : vector<1x256xf32> to vector<8x256xf32>
    %22 = arith.addf %19, %21 : vector<8x256xf32>
    %cst_16 = arith.constant 0.000000e+00 : f32
    %23 = vector.broadcast %cst_16 : f32 to vector<8x256xf32>
    %24 = arith.maximumf %22, %23 : vector<8x256xf32>
    %c0_17 = arith.constant 0 : index
    %c0_18 = arith.constant 0 : index
    %25 = vector.load %arg8[%c0_17, %c0_18] : memref<1x256xf32, #tpu.memory_space<vmem>>, vector<1x256xf32>
    %26 = vector.broadcast %25 : vector<1x256xf32> to vector<8x256xf32>
    %27 = arith.mulf %24, %26 : vector<8x256xf32>
    %cst_19 = arith.constant dense<0.000000e+00> : vector<8xf32>
    %28 = vector.multi_reduction <add>, %27, %cst_19 [1] : vector<8x256xf32> to vector<8xf32>
    %29 = vector.shape_cast %28 : vector<8xf32> to vector<8x1xf32>
    %c0_20 = arith.constant 0 : index
    %c0_21 = arith.constant 0 : index
    %30 = memref.load %arg9[%c0_20, %c0_21] : memref<1x1xf32, #tpu.memory_space<smem>>
    %31 = vector.broadcast %30 : f32 to vector<8x1xf32>
    %32 = arith.addf %29, %31 : vector<8x1xf32>
    %c0_22 = arith.constant 0 : index
    %c0_23 = arith.constant 0 : index
    %33 = vector.load %arg10[%c0_22, %c0_23] : memref<8x1xf32, #tpu.memory_space<vmem>>, vector<8x1xf32>
    tpu.vector_store %arg10[%c0_22, %c0_23], %32 {strides = array<i32>} : memref<8x1xf32, #tpu.memory_space<vmem>>, vector<8x1xf32>,
    return
  }
  func.func @transform_0(%arg0: i32) -> (i32, i32) {
    %c0_i32 = arith.constant 0 : i32
    %c0_i32_0 = arith.constant 0 : i32
    return %arg0, %c0_i32 : i32, i32
  }
  func.func @transform_1(%arg0: i32) -> (i32, i32) {
    %c0_i32 = arith.constant 0 : i32
    %c0_i32_0 = arith.constant 0 : i32
    return %arg0, %c0_i32 : i32, i32
  }
  func.func @transform_2(%arg0: i32) -> (i32, i32) {
    %c0_i32 = arith.constant 0 : i32
    %c0_i32_0 = arith.constant 0 : i32
    %c0_i32_1 = arith.constant 0 : i32
    return %c0_i32, %c0_i32_0 : i32, i32
  }
  func.func @transform_3(%arg0: i32) -> (i32, i32) {
    %c0_i32 = arith.constant 0 : i32
    %c0_i32_0 = arith.constant 0 : i32
    %c0_i32_1 = arith.constant 0 : i32
    return %c0_i32, %c0_i32_0 : i32, i32
  }
  func.func @transform_4(%arg0: i32) -> (i32, i32) {
    %c0_i32 = arith.constant 0 : i32
    %c0_i32_0 = arith.constant 0 : i32
    %c0_i32_1 = arith.constant 0 : i32
    return %c0_i32, %c0_i32_0 : i32, i32
  }
  func.func @transform_5(%arg0: i32) -> (i32, i32) {
    %c0_i32 = arith.constant 0 : i32
    %c0_i32_0 = arith.constant 0 : i32
    %c0_i32_1 = arith.constant 0 : i32
    return %c0_i32, %c0_i32_0 : i32, i32
  }
  func.func @transform_6(%arg0: i32) -> (i32, i32) {
    %c0_i32 = arith.constant 0 : i32
    %c0_i32_0 = arith.constant 0 : i32
    %c0_i32_1 = arith.constant 0 : i32
    return %c0_i32, %c0_i32_0 : i32, i32
  }
  func.func @transform_7(%arg0: i32) -> (i32, i32) {
    %c0_i32 = arith.constant 0 : i32
    %c0_i32_0 = arith.constant 0 : i32
    %c0_i32_1 = arith.constant 0 : i32
    return %c0_i32, %c0_i32_0 : i32, i32
  }
  func.func @transform_8(%arg0: i32) -> (i32, i32) {
    %c0_i32 = arith.constant 0 : i32
    %c0_i32_0 = arith.constant 0 : i32
    %c0_i32_1 = arith.constant 0 : i32
    return %c0_i32, %c0_i32_0 : i32, i32
  }
  func.func @transform_9(%arg0: i32) -> (i32, i32) {
    %c0_i32 = arith.constant 0 : i32
    %c0_i32_0 = arith.constant 0 : i32
    return %arg0, %c0_i32 : i32, i32
  }
}

</mosaic_0001>

<llo_original>
// kernel: critic_forward.1
$region0: #{critic_forward.1}
  #allocation0 [shape = 'u32[]', space=smem, size = 0x4, offset = 0x4, fixed_abs, tag = 'smem constant byte address 0x4 - core index']
  #allocation1 [shape = 'u32[144,128]{1,0:T(1,128)}', space=vmem, size = 0x12000, scoped, tag = 'internal scratch']
  #allocation2 [shape = 'f32[1,1]{1,0:T(1,128)S(6)}', space=smem, size = 0x200, scoped, tag = 'scoped memory for critic_forward.1']
  %s0 = inlined_call_operand.vmem [shape: f32[8,16], index: 0, kind: input, shape index: {}]
  %s1 = inlined_call_operand.vmem [shape: f32[8,8], index: 1, kind: input, shape index: {}]
  %s2 = inlined_call_operand.vmem [shape: f32[16,256], index: 2, kind: input, shape index: {}]
  %s3 = inlined_call_operand.vmem [shape: f32[8,256], index: 3, kind: input, shape index: {}]
  %s4 = inlined_call_operand.vmem [shape: f32[1,256], index: 4, kind: input, shape index: {}]
  %s5 = inlined_call_operand.hbm [shape: f32[256,256], index: 5, kind: input, shape index: {}]
  %s6 = inlined_call_operand.vmem [shape: f32[1,256], index: 6, kind: input, shape index: {}]
  %s7 = inlined_call_operand.vmem [shape: f32[1,256], index: 7, kind: input, shape index: {}]
  %s8 = inlined_call_operand.<no memory space> [shape: f32[1,1], index: 8, kind: input, shape index: {}]
  %s9 = inlined_call_operand.vmem [shape: f32[8,1], index: 9, kind: output, shape index: {}]
  %s10 = sld [smem:[#allocation0]]
  $region50: #{critic_forward.1} parent=0
    _
  %s12 = ssub.s32 1, %s10
  %s13 = scalar_select 0, %s12, %s10
  %14 = sst [smem:[#allocation2]] %s8
  $region1: #{critic_forward.1} parent=0
    #allocation3 [shape = 'u8[262144]{0}', space=vmem, size = 0x40000, scoped, tag = 'input window, operand 5, single buffered']
    #allocation4 [shape = 's32[1]{0}', space=sflag, size = 0x4, scoped, tag = 'scoped memory for critic_forward.1']
    %15 = vsyncpa [#allocation4], 0
    // Predicated region
    $region2: #{critic_forward.1} parent=1 // pred_check
      _
    $region3: #{critic_forward.1} parent=1 // pred_check_branch
      %17 = sbr.rel (0) target = $region5
    $region4: #{critic_forward.1} parent=1 // pred_region
      _
    $region5: #{critic_forward.1} parent=1 // pred_fallthru
      _
    // Predicated region
    $region6: #{critic_forward.1} parent=1 // pred_check
      _
    $region7: #{critic_forward.1} parent=1 // pred_check_branch
      %19 = sbr.rel (0) target = $region9
    $region8: #{critic_forward.1} parent=1 // pred_region
      _
    $region9: #{critic_forward.1} parent=1 // pred_fallthru
      _
    // Predicated region
    $region10: #{critic_forward.1} parent=1 // pred_check
      _
    $region11: #{critic_forward.1} parent=1 // pred_check_branch
      %21 = sbr.rel (0) target = $region13
    $region12: #{critic_forward.1} parent=1 // pred_region
      _
    $region13: #{critic_forward.1} parent=1 // pred_fallthru
      _
    // Predicated region
    $region14: #{critic_forward.1} parent=1 // pred_check
      _
    $region15: #{critic_forward.1} parent=1 // pred_check_branch
      %23 = sbr.rel (0) target = $region17
    $region16: #{critic_forward.1} parent=1 // pred_region
      _
    $region17: #{critic_forward.1} parent=1 // pred_fallthru
      _
    // Predicated region
    $region18: #{critic_forward.1} parent=1 // pred_check
      _
    $region19: #{critic_forward.1} parent=1 // pred_check_branch
      %25 = sbr.rel (0) target = $region21
    $region20: #{critic_forward.1} parent=1 // pred_region
      _
    $region21: #{critic_forward.1} parent=1 // pred_fallthru
      _
    // Predicated region
    $region22: #{critic_forward.1} parent=1 // pred_check
      _
    $region23: #{critic_forward.1} parent=1 // pred_check_branch
      %27 = sbr.rel (0) target = $region25
    $region24: #{critic_forward.1} parent=1 // pred_region
      %s29 = ssub.s32 8192, 8192
      %30 = vsyncadd [#allocation4], %s29
      %s31 = sshll.u32 [#allocation3], 4
      %s32 = int_to_ptr.vmem [resolvable:$true] %s31
      %37 = dma.hbm_to_vmem [thread:$0]  %s5, 8192, %s32, [#allocation4], 256, 256, 16
    $region25: #{critic_forward.1} parent=1 // pred_fallthru
      _
    // Predicated region
    $region26: #{critic_forward.1} parent=1 // pred_check
      _
    $region27: #{critic_forward.1} parent=1 // pred_check_branch
      %39 = sbr.rel (0) target = $region29
    $region28: #{critic_forward.1} parent=1 // pred_region
      _
    $region29: #{critic_forward.1} parent=1 // pred_fallthru
      _
    // Predicated region
    $region30: #{critic_forward.1} parent=1 // pred_check
      _
    $region31: #{critic_forward.1} parent=1 // pred_check_branch
      %41 = sbr.rel (0) target = $region33
    $region32: #{critic_forward.1} parent=1 // pred_region
      _
    $region33: #{critic_forward.1} parent=1 // pred_fallthru
      _
    // Predicated region
    $region34: #{critic_forward.1} parent=1 // pred_check
      _
    $region35: #{critic_forward.1} parent=1 // pred_check_branch
      %43 = sbr.rel (0) target = $region37
    $region36: #{critic_forward.1} parent=1 // pred_region
      _
    $region37: #{critic_forward.1} parent=1 // pred_fallthru
      _
    // Predicated region
    $region38: #{critic_forward.1} parent=1 // pred_check
      _
    $region39: #{critic_forward.1} parent=1 // pred_check_branch
      %45 = sbr.rel (0) target = $region41
    $region40: #{critic_forward.1} parent=1 // pred_region
      %46 = dma.done [#allocation4], 8192
    $region41: #{critic_forward.1} parent=1 // pred_fallthru
      _
    %v48 = vld [vmem:[%s0] sm:$0xff]
    %v49 = vpack.c.bf16 %v48, %v48
    %v50 = vld [vmem:[%s1] sm:$0xff]
    %v51 = vpack.c.bf16 %v50, %v50
    %v52 = vld [vmem:[%s2] sm:$0xff]
    %v53 = vld [vmem:[%s2 + $0x8] sm:$0xff]
    %v54 = vld [vmem:[%s2 + $0x10] sm:$0xff]
    %v55 = vld [vmem:[%s2 + $0x18] sm:$0xff]
    %v56 = vpack.c.bf16 %v54, %v52
    %v57 = vpack.c.bf16 %v55, %v53
    %v58 = vld [vmem:[%s3] sm:$0xff]
    %v59 = vld [vmem:[%s3 + $0x8] sm:$0xff]
    %v60 = vpack.c.bf16 %v58, %v58
    %v61 = vpack.c.bf16 %v59, %v59
    %vm62 = vcmask 64512
    %v64 = vsel %vm62, %v51, 0
    %vm66 = vcmask 1043456
    %v68 = vsel %vm66, %v60, 0
    %v71 = vsel %vm66, %v61, 0
    %73 = vmatprep.subr.bf16.mxu0 %v71
    %74 = vmatpush1.bf16.msra.mxu0 %v68
    %75 = vmatprep.subr.bf16.mxu0 0
    %76 = vmatpush1.bf16.msra.mxu0 0
    %77 = vmatprep.subr.bf16.mxu0 0
    %78 = vmatpush1.bf16.msra.mxu0 0
    %79 = vmatprep.subr.bf16.mxu0 0
    %80 = vmatpush1.bf16.msra.mxu0 0
    %81 = vmatprep.subr.bf16.mxu0 0
    %82 = vmatpush1.bf16.msra.mxu0 0
    %83 = vmatprep.subr.bf16.mxu0 0
    %84 = vmatpush1.bf16.msra.mxu0 0
    %85 = vmatprep.subr.bf16.mxu0 0
    %86 = vmatpush1.bf16.msra.mxu0 0
    %87 = vmatprep.subr.bf16.mxu0 0
    %88 = vmatpush1.bf16.msra.mxu0 0
    %89 = vmatprep.subr.bf16.mxu0 0
    %90 = vmatpush1.bf16.msra.mxu0 0
    %91 = vmatprep.subr.bf16.mxu0 0
    %92 = vmatpush1.bf16.msra.mxu0 0
    %93 = vmatprep.subr.bf16.mxu0 0
    %94 = vmatpush1.bf16.msra.mxu0 0
    %95 = vmatprep.subr.bf16.mxu0 0
    %96 = vmatpush1.bf16.msra.mxu0 0
    %97 = vmatprep.subr.bf16.mxu0 0
    %98 = vmatpush1.bf16.msra.mxu0 0
    %99 = vmatprep.subr.bf16.mxu0 0
    %100 = vmatpush1.bf16.msra.mxu0 0
    %101 = vmatprep.subr.bf16.mxu0 0
    %102 = vmatpush1.bf16.msra.mxu0 0
    %103 = vmatprep.subr.bf16.mxu0 0
    %104 = vmatpush1.bf16.msra.mxu0 0
    %105 = vmatprep.mubr.bf16.mxu0 0
    %106 = vmatmul.mubr.bf16.gmra.mrb[0].mxu0 %v64
    %v107 = vpop.f32.mrb[0].mxu0
    %v108 = vadd.f32 0.0, %v107
    %v109 = vpop.f32.mrb[0].mxu0
    %v110 = vadd.f32 0.0, %v109
    %v111 = vpop.f32.mrb[0].mxu0
    %v112 = vpop.f32.mrb[0].mxu0
    %113 = vdwg.mxu0
    %vm114 = vcmask 130048
    %v116 = vsel %vm114, %v49, 0
    %118 = vmatprep.subr.bf16.mxu0 %v57
    %119 = vmatpush1.bf16.msra.mxu0 %v56
    %120 = vmatprep.subr.bf16.mxu0 0
    %121 = vmatpush1.bf16.msra.mxu0 0
    %122 = vmatprep.subr.bf16.mxu0 0
    %123 = vmatpush1.bf16.msra.mxu0 0
    %124 = vmatprep.subr.bf16.mxu0 0
    %125 = vmatpush1.bf16.msra.mxu0 0
    %126 = vmatprep.subr.bf16.mxu0 0
    %127 = vmatpush1.bf16.msra.mxu0 0
    %128 = vmatprep.subr.bf16.mxu0 0
    %129 = vmatpush1.bf16.msra.mxu0 0
    %130 = vmatprep.subr.bf16.mxu0 0
    %131 = vmatpush1.bf16.msra.mxu0 0
    %132 = vmatprep.subr.bf16.mxu0 0
    %133 = vmatpush1.bf16.msra.mxu0 0
    %134 = vmatprep.subr.bf16.mxu0 0
    %135 = vmatpush1.bf16.msra.mxu0 0
    %136 = vmatprep.subr.bf16.mxu0 0
    %137 = vmatpush1.bf16.msra.mxu0 0
    %138 = vmatprep.subr.bf16.mxu0 0
    %139 = vmatpush1.bf16.msra.mxu0 0
    %140 = vmatprep.subr.bf16.mxu0 0
    %141 = vmatpush1.bf16.msra.mxu0 0
    %142 = vmatprep.subr.bf16.mxu0 0
    %143 = vmatpush1.bf16.msra.mxu0 0
    %144 = vmatprep.subr.bf16.mxu0 0
    %145 = vmatpush1.bf16.msra.mxu0 0
    %146 = vmatprep.subr.bf16.mxu0 0
    %147 = vmatpush1.bf16.msra.mxu0 0
    %148 = vmatprep.subr.bf16.mxu0 0
    %149 = vmatpush1.bf16.msra.mxu0 0
    %150 = vmatprep.mubr.bf16.mxu0 0
    %151 = vmatmul.mubr.bf16.gmra.mrb[0].mxu0 %v116
    %v152 = vpop.f32.mrb[0].mxu0
    %v153 = vadd.f32 %v108, %v152
    %v154 = vpop.f32.mrb[0].mxu0
    %v155 = vadd.f32 %v110, %v154
    %v156 = vpop.f32.mrb[0].mxu0
    %v157 = vpop.f32.mrb[0].mxu0
    %158 = vdwg.mxu0
    %v159 = vld [vmem:[%s4] sm:$0x3]
    %v161 = vlaneseq
    %v162 = vshrl.u32 %v161, 7
    %v163 = vsub.s32 0, %v162
    %v164 = vrot.slane %v159, %v163
    %v165 = vlaneseq
    %v166 = vshrl.u32 %v165, 7
    %v167 = vsub.s32 1, %v166
    %v168 = vrot.slane %v159, %v167
    %v171 = vadd.f32 %v153, %v164
    %v172 = vadd.f32 %v155, %v168
    %v173 = vmax.f32 %v171, 0.0
    %v174 = vmax.f32 %v172, 0.0
    %v175 = vpack.c.bf16 %v173, %v173
    %v176 = vpack.c.bf16 %v174, %v174
    %v177 = vld [vmem:[#allocation3] sm:$0xff]
    %v178 = vld [vmem:[#allocation3 + $0x8] sm:$0xff]
    %v179 = vld [vmem:[#allocation3 + $0x10] sm:$0xff]
    %v180 = vld [vmem:[#allocation3 + $0x18] sm:$0xff]
    %v181 = vld [vmem:[#allocation3 + $0x20] sm:$0xff]
    %v182 = vld [vmem:[#allocation3 + $0x28] sm:$0xff]
    %v183 = vld [vmem:[#allocation3 + $0x30] sm:$0xff]
    %v184 = vld [vmem:[#allocation3 + $0x38] sm:$0xff]
    %v185 = vld [vmem:[#allocation3 + $0x40] sm:$0xff]
    %v186 = vld [vmem:[#allocation3 + $0x48] sm:$0xff]
    %v187 = vld [vmem:[#allocation3 + $0x50] sm:$0xff]
    %v188 = vld [vmem:[#allocation3 + $0x58] sm:$0xff]
    %v189 = vld [vmem:[#allocation3 + $0x60] sm:$0xff]
    %v190 = vld [vmem:[#allocation3 + $0x68] sm:$0xff]
    %v191 = vld [vmem:[#allocation3 + $0x70] sm:$0xff]
    %v192 = vld [vmem:[#allocation3 + $0x78] sm:$0xff]
    %v193 = vld [vmem:[#allocation3 + $0x80] sm:$0xff]
    %v194 = vld [vmem:[#allocation3 + $0x88] sm:$0xff]
    %v195 = vld [vmem:[#allocation3 + $0x90] sm:$0xff]
    %v196 = vld [vmem:[#allocation3 + $0x98] sm:$0xff]
    %v197 = vld [vmem:[#allocation3 + $0xa0] sm:$0xff]
    %v198 = vld [vmem:[#allocation3 + $0xa8] sm:$0xff]
    %v199 = vld [vmem:[#allocation3 + $0xb0] sm:$0xff]
    %v200 = vld [vmem:[#allocation3 + $0xb8] sm:$0xff]
    %v201 = vld [vmem:[#allocation3 + $0xc0] sm:$0xff]
    %v202 = vld [vmem:[#allocation3 + $0xc8] sm:$0xff]
    %v203 = vld [vmem:[#allocation3 + $0xd0] sm:$0xff]
    %v204 = vld [vmem:[#allocation3 + $0xd8] sm:$0xff]
    %v205 = vld [vmem:[#allocation3 + $0xe0] sm:$0xff]
    %v206 = vld [vmem:[#allocation3 + $0xe8] sm:$0xff]
    %v207 = vld [vmem:[#allocation3 + $0xf0] sm:$0xff]
    %v208 = vld [vmem:[#allocation3 + $0xf8] sm:$0xff]
    %v209 = vld [vmem:[#allocation3 + $0x100] sm:$0xff]
    %v210 = vld [vmem:[#allocation3 + $0x108] sm:$0xff]
    %v211 = vld [vmem:[#allocation3 + $0x110] sm:$0xff]
    %v212 = vld [vmem:[#allocation3 + $0x118] sm:$0xff]
    %v213 = vld [vmem:[#allocation3 + $0x120] sm:$0xff]
    %v214 = vld [vmem:[#allocation3 + $0x128] sm:$0xff]
    %v215 = vld [vmem:[#allocation3 + $0x130] sm:$0xff]
    %v216 = vld [vmem:[#allocation3 + $0x138] sm:$0xff]
    %v217 = vld [vmem:[#allocation3 + $0x140] sm:$0xff]
    %v218 = vld [vmem:[#allocation3 + $0x148] sm:$0xff]
    %v219 = vld [vmem:[#allocation3 + $0x150] sm:$0xff]
    %v220 = vld [vmem:[#allocation3 + $0x158] sm:$0xff]
    %v221 = vld [vmem:[#allocation3 + $0x160] sm:$0xff]
    %v222 = vld [vmem:[#allocation3 + $0x168] sm:$0xff]
    %v223 = vld [vmem:[#allocation3 + $0x170] sm:$0xff]
    %v224 = vld [vmem:[#allocation3 + $0x178] sm:$0xff]
    %v225 = vld [vmem:[#allocation3 + $0x180] sm:$0xff]
    %v226 = vld [vmem:[#allocation3 + $0x188] sm:$0xff]
    %v227 = vld [vmem:[#allocation3 + $0x190] sm:$0xff]
    %v228 = vld [vmem:[#allocation3 + $0x198] sm:$0xff]
    %v229 = vld [vmem:[#allocation3 + $0x1a0] sm:$0xff]
    %v230 = vld [vmem:[#allocation3 + $0x1a8] sm:$0xff]
    %v231 = vld [vmem:[#allocation3 + $0x1b0] sm:$0xff]
    %v232 = vld [vmem:[#allocation3 + $0x1b8] sm:$0xff]
    %v233 = vld [vmem:[#allocation3 + $0x1c0] sm:$0xff]
    %v234 = vld [vmem:[#allocation3 + $0x1c8] sm:$0xff]
    %v235 = vld [vmem:[#allocation3 + $0x1d0] sm:$0xff]
    %v236 = vld [vmem:[#allocation3 + $0x1d8] sm:$0xff]
    %v237 = vld [vmem:[#allocation3 + $0x1e0] sm:$0xff]
    %v238 = vld [vmem:[#allocation3 + $0x1e8] sm:$0xff]
    %v239 = vld [vmem:[#allocation3 + $0x1f0] sm:$0xff]
    %v240 = vld [vmem:[#allocation3 + $0x1f8] sm:$0xff]
    %v241 = vpack.c.bf16 %v179, %v177
    %v242 = vpack.c.bf16 %v180, %v178
    %v243 = vpack.c.bf16 %v183, %v181
    %v244 = vpack.c.bf16 %v184, %v182
    %v245 = vpack.c.bf16 %v187, %v185
    %v246 = vpack.c.bf16 %v188, %v186
    %v247 = vpack.c.bf16 %v191, %v189
    %v248 = vpack.c.bf16 %v192, %v190
    %v249 = vpack.c.bf16 %v195, %v193
    %v250 = vpack.c.bf16 %v196, %v194
    %v251 = vpack.c.bf16 %v199, %v197
    %v252 = vpack.c.bf16 %v200, %v198
    %v253 = vpack.c.bf16 %v203, %v201
    %v254 = vpack.c.bf16 %v204, %v202
    %v255 = vpack.c.bf16 %v207, %v205
    %v256 = vpack.c.bf16 %v208, %v206
    %v257 = vpack.c.bf16 %v211, %v209
    %v258 = vpack.c.bf16 %v212, %v210
    %v259 = vpack.c.bf16 %v215, %v213
    %v260 = vpack.c.bf16 %v216, %v214
    %v261 = vpack.c.bf16 %v219, %v217
    %v262 = vpack.c.bf16 %v220, %v218
    %v263 = vpack.c.bf16 %v223, %v221
    %v264 = vpack.c.bf16 %v224, %v222
    %v265 = vpack.c.bf16 %v227, %v225
    %v266 = vpack.c.bf16 %v228, %v226
    %v267 = vpack.c.bf16 %v231, %v229
    %v268 = vpack.c.bf16 %v232, %v230
    %v269 = vpack.c.bf16 %v235, %v233
    %v270 = vpack.c.bf16 %v236, %v234
    %v271 = vpack.c.bf16 %v239, %v237
    %v272 = vpack.c.bf16 %v240, %v238
    %v273 = vld [vmem:[%s6] sm:$0x3]
    %v275 = vlaneseq
    %v276 = vshrl.u32 %v275, 7
    %v277 = vsub.s32 0, %v276
    %v278 = vrot.slane %v273, %v277
    %v279 = vlaneseq
    %v280 = vshrl.u32 %v279, 7
    %v281 = vsub.s32 1, %v280
    %v282 = vrot.slane %v273, %v281
    %285 = vmatprep.subr.bf16.mxu0 %v242
    %286 = vmatpush1.bf16.msra.mxu0 %v241
    %287 = vmatprep.subr.bf16.mxu0 %v244
    %288 = vmatpush1.bf16.msra.mxu0 %v243
    %289 = vmatprep.subr.bf16.mxu0 %v246
    %290 = vmatpush1.bf16.msra.mxu0 %v245
    %291 = vmatprep.subr.bf16.mxu0 %v248
    %292 = vmatpush1.bf16.msra.mxu0 %v247
    %293 = vmatprep.subr.bf16.mxu0 %v250
    %294 = vmatpush1.bf16.msra.mxu0 %v249
    %295 = vmatprep.subr.bf16.mxu0 %v252
    %296 = vmatpush1.bf16.msra.mxu0 %v251
    %297 = vmatprep.subr.bf16.mxu0 %v254
    %298 = vmatpush1.bf16.msra.mxu0 %v253
    %299 = vmatprep.subr.bf16.mxu0 %v256
    %300 = vmatpush1.bf16.msra.mxu0 %v255
    %301 = vmatprep.subr.bf16.mxu0 %v258
    %302 = vmatpush1.bf16.msra.mxu0 %v257
    %303 = vmatprep.subr.bf16.mxu0 %v260
    %304 = vmatpush1.bf16.msra.mxu0 %v259
    %305 = vmatprep.subr.bf16.mxu0 %v262
    %306 = vmatpush1.bf16.msra.mxu0 %v261
    %307 = vmatprep.subr.bf16.mxu0 %v264
    %308 = vmatpush1.bf16.msra.mxu0 %v263
    %309 = vmatprep.subr.bf16.mxu0 %v266
    %310 = vmatpush1.bf16.msra.mxu0 %v265
    %311 = vmatprep.subr.bf16.mxu0 %v268
    %312 = vmatpush1.bf16.msra.mxu0 %v267
    %313 = vmatprep.subr.bf16.mxu0 %v270
    %314 = vmatpush1.bf16.msra.mxu0 %v269
    %315 = vmatprep.subr.bf16.mxu0 %v272
    %316 = vmatpush1.bf16.msra.mxu0 %v271
    %317 = vmatprep.mubr.bf16.mxu0 %v176
    %318 = vmatmul.mubr.bf16.gmra.mrb[0].mxu0 %v175
    %v319 = vpop.f32.mrb[0].mxu0
    %v320 = vadd.f32 %v278, %v319
    %v321 = vpop.f32.mrb[0].mxu0
    %v322 = vadd.f32 %v282, %v321
    %v323 = vpop.f32.mrb[0].mxu0
    %v324 = vpop.f32.mrb[0].mxu0
    %325 = vdwg.mxu0
    %v326 = vmax.f32 %v320, 0.0
    %v327 = vmax.f32 %v322, 0.0
    %v328 = vld [vmem:[%s7] sm:$0x3]
    %v330 = vlaneseq
    %v331 = vshrl.u32 %v330, 7
    %v332 = vsub.s32 0, %v331
    %v333 = vrot.slane %v328, %v332
    %v334 = vlaneseq
    %v335 = vshrl.u32 %v334, 7
    %v336 = vsub.s32 1, %v335
    %v337 = vrot.slane %v328, %v336
    %v340 = vmul.f32 %v326, %v333
    %v341 = vmul.f32 %v327, %v337
    %v342 = vadd.f32 %v340, %v341
    %343 = vadd.xlane.f32.xlu0 %v342
    %v344 = vpop.xlane.xlu0 %343
    %s345 = sld [smem:[#allocation2]]
    %v346 = vstv %s345
    %v347 = vadd.f32 %v344, %v346
    %vm348 = vcmask 7168
    %349 = vst.msk [vmem:[%s9] sm:$0xff] %vm348, %v347
    // Predicated region
    $region42: #{critic_forward.1} parent=1 // pred_check
      _
    $region43: #{critic_forward.1} parent=1 // pred_check_branch
      %351 = sbr.rel (0) target = $region45
    $region44: #{critic_forward.1} parent=1 // pred_region
      _
    $region45: #{critic_forward.1} parent=1 // pred_fallthru
      _
    // Predicated region
    $region46: #{critic_forward.1} parent=1 // pred_check
      _
    $region47: #{critic_forward.1} parent=1 // pred_check_branch
      %353 = sbr.rel (0) target = $region49
    $region48: #{critic_forward.1} parent=1 // pred_region
      _
    $region49: #{critic_forward.1} parent=1 // pred_fallthru
      _
    %354 = vsyncpa [#allocation4], 1

</llo_original>
